<compile_context>
chip_gen: v6e
topology: v6e:2x2x1
jax: 0.10.0
libtpu: 0.0.40
codegen_flags: <defaults>
</compile_context>

<pallas_src>
import jax
import jax.numpy as jnp
from jax.experimental import pallas as pl
from jax.experimental.pallas import tpu as pltpu


# ------------------------------ Pallas kernel ------------------------------ #
def _patch_embed_matmul_kernel(x_ref, w_ref, b_ref, o_ref):
    # x_ref: (tm, Kp) bf16 packed patch rows; w_ref: (Kp, Ep) bf16 weight
    # (resident across grid steps); b_ref: (1, Ep) f32 bias.
    # MXU matmul with f32 accumulation.
    acc = jnp.dot(x_ref[...], w_ref[...], preferred_element_type=jnp.float32)
    o_ref[...] = (acc + b_ref[...]).astype(o_ref.dtype)


_ROW_TILE_CAP = 1024           # rows per grid step; 512-2048 all amortize the
                               # ~0.35 us/step overhead while keeping overlap.
_VMEM_TILE_BUDGET = 24 << 20   # double-buffered tiles + resident weight budget:
                               # comfortably inside v7x's 64 MiB physical VMEM
                               # and v5e/v6e default scoped limits.


def _patch_linear(lhs, w_mat, bias_row, *, out_dtype=jnp.float32,
                  row_tile=_ROW_TILE_CAP):
    """lhs: (M, Kp) packed patch rows; w_mat: (Kp, Ep); bias_row: (1, Ep) -> (M, Ep)."""
    M, Kp = lhs.shape
    Ep = w_mat.shape[1]
    lhs_b = jnp.dtype(lhs.dtype).itemsize
    w_b = jnp.dtype(w_mat.dtype).itemsize
    out_b = jnp.dtype(out_dtype).itemsize

    # Row tile: capped and VMEM-budgeted, independent of M.  The grid grows with
    # M instead; ("parallel",) lets the compiler shard it across TensorCores
    # only when there is more than one step (small problems stay single-step).
    resident = Kp * Ep * w_b + Ep * 4                 # weight + bias stay in VMEM
    per_row = 2 * (Kp * lhs_b + Ep * out_b)           # double-buffered lhs + out
    tm_budget = max(8, ((_VMEM_TILE_BUDGET - resident) // per_row) // 8 * 8)
    tm = min(int(row_tile), int(tm_budget), ((M + 7) // 8) * 8)
    tm = max(8, (tm // 8) * 8)                        # sublane-align
    grid_m = pl.cdiv(M, tm)
    # NOTE: no jnp.pad for a ragged tail -- Pallas masks the out-of-bounds rows
    # of the final block itself (padded lhs rows only feed dropped output rows).

    vmem_need = resident + tm * per_row
    vmem_limit = int(min(max(vmem_need + (2 << 20), 16 << 20), 32 << 20))

    out = pl.pallas_call(
        _patch_embed_matmul_kernel,
        out_shape=jax.ShapeDtypeStruct((M, Ep), out_dtype),
        grid_spec=pltpu.PrefetchScalarGridSpec(
            num_scalar_prefetch=0,
            grid=(grid_m,),
            in_specs=[
                # lhs tiles stream; weight & bias use a constant index_map so
                # they stay resident in VMEM across all grid steps.  (If tm is
                # ever shrunk and the lhs DMA becomes exposed, add
                # pipeline_mode=pl.Buffered(3) on the lhs spec only.)
                pl.BlockSpec((tm, Kp), lambda i: (i, 0)),
                pl.BlockSpec((Kp, Ep), lambda i: (0, 0)),
                pl.BlockSpec((1, Ep), lambda i: (0, 0)),
            ],
            out_specs=pl.BlockSpec((tm, Ep), lambda i: (i, 0)),
        ),
        compiler_params=pltpu.CompilerParams(
            dimension_semantics=("parallel",),
            # Ask XLA to fuse the wrapper-side patch transpose + bf16 cast into
            # the kernel's lhs operand instead of materializing it in HBM.
            allow_input_fusion=[True, False, False],
            vmem_limit_bytes=vmem_limit,
        ),
    )(lhs, w_mat, bias_row)
    return out


# -------------------------------- PatchEmbed ------------------------------- #
class PatchEmbed:
    """JAX/Pallas port of the PyTorch PatchEmbed module (forward only)."""

    def __init__(self, img_size=(16, 16, 16, 4), patch_size=(4, 4, 4, 1),
                 in_chans=2, embed_dim=32, norm_layer=None, flatten=True,
                 out_dtype=jnp.float32, row_tile=_ROW_TILE_CAP):
        assert len(patch_size) == 4
        assert patch_size[3] == 1, "temporal axis merging is not implemented yet"
        # TODO(synk): only the default norm_layer=None (Identity) is implemented.
        assert norm_layer is None
        assert img_size[0] % patch_size[0] == 0
        assert img_size[1] % patch_size[1] == 0
        assert img_size[2] % patch_size[2] == 0
        assert img_size[3] % patch_size[3] == 0
        self.img_size = img_size
        self.patch_size = patch_size
        self.grid_size = (img_size[0] // patch_size[0],
                          img_size[1] // patch_size[1],
                          img_size[2] // patch_size[2])
        self.t_tokens = img_size[3] // patch_size[3]
        self.embed_dim = embed_dim
        self.in_chans = in_chans
        self.flatten = flatten
        self.out_dtype = out_dtype   # jnp.bfloat16 halves store traffic if OK downstream
        self.row_tile = row_tile
        self.in_features = (in_chans * patch_size[0] * patch_size[1]
                            * patch_size[2] * patch_size[3])

        # Deterministic parameter init (synthetic; mirrors nn.Linear shapes).
        key = jax.random.PRNGKey(42)
        kw, kb = jax.random.split(key)
        bound = 1.0 / jnp.sqrt(self.in_features)
        # PyTorch Linear weight layout: (out_features, in_features), with the
        # torch feature order (sH, sW, sD, sT, C) from proj()'s permute/view.
        self.weight = jax.random.uniform(
            kw, (embed_dim, self.in_features), jnp.float32, -bound, bound)
        self.bias = jax.random.uniform(
            kb, (embed_dim,), jnp.float32, -bound, bound)

        # ---- one-time packing of the parameters for the kernel ----------- #
        sH, sW, sD, sT = patch_size
        C, E, Tt, K = in_chans, embed_dim, self.t_tokens, self.in_features
        # Reorder K from torch's (sh, sw, sd, st, c) to (c, sh, sw, sd, st) so
        # the wrapper-side gather keeps the input's contiguous (sD, T) chunks.
        w_t = self.weight.T.reshape(sH, sW, sD, sT, C, E)
        w_perm = jnp.transpose(w_t, (4, 0, 1, 2, 3, 5)).reshape(K, E)

        # Block-diagonal "token packing" buys lane-dense (Tt*E wide) output
        # stores at the price of Tt x more weight bytes / MXU flops, so it is
        # only used when E < 128 (where the plain matmul's stores would be
        # masked partial-lane writes).  For E >= 128 use the plain weight.
        self.pack_tokens = E < 128
        if self.pack_tokens:
            # The packing relies on sT == 1 (each temporal token owns exactly
            # one input time step); keep the assert next to the construction.
            assert sT == 1
            eye = jnp.eye(Tt, dtype=w_perm.dtype)
            w_big = jnp.einsum("ke,ts->ktse", w_perm, eye).reshape(K * Tt, Tt * E)
            self.w_mat = w_big.astype(jnp.bfloat16)                    # bf16 MXU operand
            self.bias_row = jnp.tile(self.bias, (Tt,)).reshape(1, Tt * E)  # f32
        else:
            self.w_mat = w_perm.astype(jnp.bfloat16)
            self.bias_row = self.bias.reshape(1, E)

        self._forward = jax.jit(self._forward_impl)

    def __call__(self, x):
        return self._forward(x)

    def _forward_impl(self, x):
        B, C, H, W, D, T = x.shape
        assert H == self.img_size[0]
        assert W == self.img_size[1]
        assert D == self.img_size[2]
        assert T == self.img_size[3], "temporal extent must match img_size[3]"
        assert C == self.in_chans
        pH, pW, pD = self.grid_size
        sH, sW, sD, sT = self.patch_size
        Tt = self.t_tokens
        E = self.embed_dim

        # Patch gather: free reshape + ONE transpose fused with the bf16 cast.
        # allow_input_fusion on the kernel's lhs operand asks XLA to fuse this
        # transpose/cast into the pallas_call input instead of materializing
        # the packed patch matrix in HBM.
        # TODO(synk): the strided (sH, sW, sD) sub-blocks cannot be expressed by
        # a BlockSpec, and an in-kernel 8-D relayout does not lower cleanly in
        # Mosaic, so the gather itself stays on the XLA side.
        if self.pack_tokens:
            # rows = (b, ph, pw, pd); cols = (c, sh, sw, sd, t): the contiguous
            # (sD, T) chunks of the input are never broken up.
            xr = x.reshape(B, C, pH, sH, pW, sW, pD, sD * T)
            xp = jnp.transpose(xr.astype(jnp.bfloat16), (0, 2, 4, 6, 1, 3, 5, 7))
            lhs = xp.reshape(B * pH * pW * pD, C * sH * sW * sD * T)
        else:
            # rows = (b, ph, pw, pd, tt); cols = (c, sh, sw, sd)   [sT == 1]
            xr = x.reshape(B, C, pH, sH, pW, sW, pD, sD, Tt)
            xp = jnp.transpose(xr.astype(jnp.bfloat16), (0, 2, 4, 6, 8, 1, 3, 5, 7))
            lhs = xp.reshape(B * pH * pW * pD * Tt, self.in_features)

        # Hot path: Linear on the MXU (bf16 x bf16, f32 accumulation).
        out2 = _patch_linear(lhs, self.w_mat, self.bias_row,
                             out_dtype=self.out_dtype, row_tile=self.row_tile)

        # Token order (ph, pw, pd, tt): exactly torch's flatten(2).transpose(1, 2).
        if self.flatten:
            return out2.reshape(B, pH * pW * pD * Tt, E)
        out = out2.reshape(B, pH, pW, pD, Tt, E)
        return jnp.transpose(out, (0, 5, 1, 2, 3, 4))   # (B, E, pH, pW, pD, Tt)


# ---------------------------------- main ----------------------------------- #
if __name__ == "__main__":
    # Small shapes consistent with the module: B=2, C=2, H=W=D=16, T=4,
    # patch (4,4,4,1) -> in_features = 2*4*4*4*1 = 128, embed_dim = 32.
    B, C, H, W, D, T = 2, 2, 16, 16, 16, 4
    key = jax.random.PRNGKey(0)
    x = jax.random.normal(key, (B, C, H, W, D, T), dtype=jnp.float32)

    model = PatchEmbed(img_size=(H, W, D, T), patch_size=(4, 4, 4, 1),
                       in_chans=C, embed_dim=32, flatten=True)
    out = jax.block_until_ready(model(x))

    # Pure-JAX f32 reference using the exact torch ordering.
    pH, pW, pD = model.grid_size
    sH, sW, sD, sT = model.patch_size
    Tt = model.t_tokens
    E = model.embed_dim
    xr = x.reshape(B, C, pH, sH, pW, sW, pD, sD, Tt, sT)
    xp = jnp.transpose(xr, (0, 2, 4, 6, 8, 3, 5, 7, 9, 1)).reshape(-1, model.in_features)
    ref_tok = (xp @ model.weight.T + model.bias).reshape(B, pH * pW * pD * Tt, E)

    assert out.shape == (B, pH * pW * pD * Tt, E), out.shape
    # bf16 MXU operands (f32 accumulation) -> looser tolerance than pure f32.
    err = float(jnp.max(jnp.abs(out - ref_tok)))
    assert jnp.allclose(out, ref_tok, atol=2e-2, rtol=2e-2), err

    # Also exercise (a) the flatten=False output path and (b) a multi-step
    # pipelined grid (row_tile=64 -> 2 grid steps). Same deterministic params.
    model_nf = PatchEmbed(img_size=(H, W, D, T), patch_size=(4, 4, 4, 1),
                          in_chans=C, embed_dim=32, flatten=False, row_tile=64)
    out_nf = jax.block_until_ready(model_nf(x))
    ref_nf = jnp.transpose(ref_tok.reshape(B, pH, pW, pD, Tt, E),
                           (0, 5, 1, 2, 3, 4))
    assert out_nf.shape == (B, E, pH, pW, pD, Tt), out_nf.shape
    err_nf = float(jnp.max(jnp.abs(out_nf - ref_nf)))
    assert jnp.allclose(out_nf, ref_nf, atol=2e-2, rtol=2e-2), err_nf

    print("KERNEL_OK")
</pallas_src>

<mosaic_0001>
module attributes {stable_mosaic.version = 11 : i64} {
  func.func @_patch_embed_matmul_kernel(%arg0: i32, %arg1: memref<128x512xbf16, #tpu.memory_space<vmem>>, %arg2: memref<512x128xbf16, #tpu.memory_space<vmem>>, %arg3: memref<1x128xf32, #tpu.memory_space<vmem>>, %arg4: memref<128x128xf32, #tpu.memory_space<vmem>>) attributes {dimension_semantics = [#tpu.dimension_semantics<parallel>], iteration_bounds = array<i64: 1>, scalar_prefetch = 0 : i64, scratch_operands = 0 : i64, tpu.core_type = #tpu.core_type<tc>, window_params = [{transform_indices = @transform_0, window_bounds = array<i64: 128, 512>}, {pipeline_mode = #tpu.pipeline_mode<synchronous>, transform_indices = @transform_1, window_bounds = array<i64: 512, 128>}, {pipeline_mode = #tpu.pipeline_mode<synchronous>, transform_indices = @transform_2, window_bounds = array<i64: 1, 128>}, {transform_indices = @transform_3, window_bounds = array<i64: 128, 128>}]} {
    %c0 = arith.constant 0 : index
    %c0_0 = arith.constant 0 : index
    %0 = vector.load %arg1[%c0, %c0_0] : memref<128x512xbf16, #tpu.memory_space<vmem>>, vector<128x512xbf16>
    %c0_1 = arith.constant 0 : index
    %c0_2 = arith.constant 0 : index
    %1 = vector.load %arg2[%c0_1, %c0_2] : memref<512x128xbf16, #tpu.memory_space<vmem>>, vector<512x128xbf16>
    %cst = arith.constant dense<0.000000e+00> : vector<128x128xf32>
    %2 = tpu.matmul %0, %1, %cst {dimension_numbers = #tpu.dot_dimension_numbers<[1], [0], [0], [1], [0, 0, 1, 1], [], []>} : vector<128x512xbf16>, vector<512x128xbf16>, vector<128x128xf32> -> vector<128x128xf32>
    %c0_3 = arith.constant 0 : index
    %c0_4 = arith.constant 0 : index
    %3 = vector.load %arg3[%c0_3, %c0_4] : memref<1x128xf32, #tpu.memory_space<vmem>>, vector<1x128xf32>
    %4 = vector.broadcast %3 : vector<1x128xf32> to vector<128x128xf32>
    %5 = arith.addf %2, %4 : vector<128x128xf32>
    %c0_5 = arith.constant 0 : index
    %c0_6 = arith.constant 0 : index
    %6 = vector.load %arg4[%c0_5, %c0_6] : memref<128x128xf32, #tpu.memory_space<vmem>>, vector<128x128xf32>
    tpu.vector_store %arg4[%c0_5, %c0_6], %5 {strides = array<i32>} : memref<128x128xf32, #tpu.memory_space<vmem>>, vector<128x128xf32>,
    return
  }
  func.func @transform_0(%arg0: i32) -> (i32, i32) {
    %c0_i32 = arith.constant 0 : i32
    %c0_i32_0 = arith.constant 0 : i32
    return %arg0, %c0_i32 : i32, i32
  }
  func.func @transform_1(%arg0: i32) -> (i32, i32) {
    %c0_i32 = arith.constant 0 : i32
    %c0_i32_0 = arith.constant 0 : i32
    %c0_i32_1 = arith.constant 0 : i32
    return %c0_i32, %c0_i32_0 : i32, i32
  }
  func.func @transform_2(%arg0: i32) -> (i32, i32) {
    %c0_i32 = arith.constant 0 : i32
    %c0_i32_0 = arith.constant 0 : i32
    %c0_i32_1 = arith.constant 0 : i32
    return %c0_i32, %c0_i32_0 : i32, i32
  }
  func.func @transform_3(%arg0: i32) -> (i32, i32) {
    %c0_i32 = arith.constant 0 : i32
    %c0_i32_0 = arith.constant 0 : i32
    return %arg0, %c0_i32 : i32, i32
  }
}

</mosaic_0001>

<llo_original>
// kernel: _forward_impl.1
$region0: #{_forward_impl.1}
  #allocation0 [shape = 'u32[]', space=smem, size = 0x4, offset = 0x4, fixed_abs, tag = 'smem constant byte address 0x4 - core index']
  #allocation1 [shape = 'u32[144,128]{1,0:T(1,128)}', space=vmem, size = 0x12000, scoped, tag = 'internal scratch']
  %s0 = inlined_call_operand.vmem [shape: bf16[128,512], index: 0, kind: input, shape index: {}]
  %s1 = inlined_call_operand.vmem [shape: bf16[512,128], index: 1, kind: input, shape index: {}]
  %s2 = inlined_call_operand.vmem [shape: f32[1,128], index: 2, kind: input, shape index: {}]
  %s3 = inlined_call_operand.vmem [shape: f32[128,128], index: 3, kind: output, shape index: {}]
  %s4 = sld [smem:[#allocation0]]
  $region22: #{_forward_impl.1} parent=0
    _
  %s6 = ssub.s32 1, %s4
  %s7 = scalar_select 0, %s6, %s4
  // Predicated region
  $region2: #{_forward_impl.1} parent=0 // pred_check
    _
  $region3: #{_forward_impl.1} parent=0 // pred_check_branch
    %9 = sbr.rel (0) target = $region5
  $region4: #{_forward_impl.1} parent=0 // pred_region
    _
  $region5: #{_forward_impl.1} parent=0 // pred_fallthru
    _
  // Predicated region
  $region6: #{_forward_impl.1} parent=0 // pred_check
    _
  $region7: #{_forward_impl.1} parent=0 // pred_check_branch
    %11 = sbr.rel (0) target = $region9
  $region8: #{_forward_impl.1} parent=0 // pred_region
    _
  $region9: #{_forward_impl.1} parent=0 // pred_fallthru
    _
  // Predicated region
  $region10: #{_forward_impl.1} parent=0 // pred_check
    _
  $region11: #{_forward_impl.1} parent=0 // pred_check_branch
    %13 = sbr.rel (0) target = $region13
  $region12: #{_forward_impl.1} parent=0 // pred_region
    _
  $region13: #{_forward_impl.1} parent=0 // pred_fallthru
    _
  %v15 = vld [vmem:[%s0] sm:$0xff]
  %v16 = vld [vmem:[%s0 + $0x8] sm:$0xff]
  %v17 = vld [vmem:[%s0 + $0x10] sm:$0xff]
  %v18 = vld [vmem:[%s0 + $0x18] sm:$0xff]
  %v19 = vld [vmem:[%s0 + $0x20] sm:$0xff]
  %v20 = vld [vmem:[%s0 + $0x28] sm:$0xff]
  %v21 = vld [vmem:[%s0 + $0x30] sm:$0xff]
  %v22 = vld [vmem:[%s0 + $0x38] sm:$0xff]
  %v23 = vld [vmem:[%s0 + $0x40] sm:$0xff]
  %v24 = vld [vmem:[%s0 + $0x48] sm:$0xff]
  %v25 = vld [vmem:[%s0 + $0x50] sm:$0xff]
  %v26 = vld [vmem:[%s0 + $0x58] sm:$0xff]
  %v27 = vld [vmem:[%s0 + $0x60] sm:$0xff]
  %v28 = vld [vmem:[%s0 + $0x68] sm:$0xff]
  %v29 = vld [vmem:[%s0 + $0x70] sm:$0xff]
  %v30 = vld [vmem:[%s0 + $0x78] sm:$0xff]
  %v31 = vld [vmem:[%s0 + $0x80] sm:$0xff]
  %v32 = vld [vmem:[%s0 + $0x88] sm:$0xff]
  %v33 = vld [vmem:[%s0 + $0x90] sm:$0xff]
  %v34 = vld [vmem:[%s0 + $0x98] sm:$0xff]
  %v35 = vld [vmem:[%s0 + $0xa0] sm:$0xff]
  %v36 = vld [vmem:[%s0 + $0xa8] sm:$0xff]
  %v37 = vld [vmem:[%s0 + $0xb0] sm:$0xff]
  %v38 = vld [vmem:[%s0 + $0xb8] sm:$0xff]
  %v39 = vld [vmem:[%s0 + $0xc0] sm:$0xff]
  %v40 = vld [vmem:[%s0 + $0xc8] sm:$0xff]
  %v41 = vld [vmem:[%s0 + $0xd0] sm:$0xff]
  %v42 = vld [vmem:[%s0 + $0xd8] sm:$0xff]
  %v43 = vld [vmem:[%s0 + $0xe0] sm:$0xff]
  %v44 = vld [vmem:[%s0 + $0xe8] sm:$0xff]
  %v45 = vld [vmem:[%s0 + $0xf0] sm:$0xff]
  %v46 = vld [vmem:[%s0 + $0xf8] sm:$0xff]
  %v47 = vld [vmem:[%s1] sm:$0xf]
  %v48 = vld [vmem:[%s1 + $0x4] sm:$0xf]
  %v49 = vld [vmem:[%s1 + $0x8] sm:$0xf]
  %v50 = vld [vmem:[%s1 + $0xc] sm:$0xf]
  %v51 = vld [vmem:[%s1 + $0x10] sm:$0xf]
  %v52 = vld [vmem:[%s1 + $0x14] sm:$0xf]
  %v53 = vld [vmem:[%s1 + $0x18] sm:$0xf]
  %v54 = vld [vmem:[%s1 + $0x1c] sm:$0xf]
  %v55 = vld [vmem:[%s1 + $0x20] sm:$0xf]
  %v56 = vld [vmem:[%s1 + $0x24] sm:$0xf]
  %v57 = vld [vmem:[%s1 + $0x28] sm:$0xf]
  %v58 = vld [vmem:[%s1 + $0x2c] sm:$0xf]
  %v59 = vld [vmem:[%s1 + $0x30] sm:$0xf]
  %v60 = vld [vmem:[%s1 + $0x34] sm:$0xf]
  %v61 = vld [vmem:[%s1 + $0x38] sm:$0xf]
  %v62 = vld [vmem:[%s1 + $0x3c] sm:$0xf]
  %v63 = vld [vmem:[%s1 + $0x40] sm:$0xf]
  %v64 = vld [vmem:[%s1 + $0x44] sm:$0xf]
  %v65 = vld [vmem:[%s1 + $0x48] sm:$0xf]
  %v66 = vld [vmem:[%s1 + $0x4c] sm:$0xf]
  %v67 = vld [vmem:[%s1 + $0x50] sm:$0xf]
  %v68 = vld [vmem:[%s1 + $0x54] sm:$0xf]
  %v69 = vld [vmem:[%s1 + $0x58] sm:$0xf]
  %v70 = vld [vmem:[%s1 + $0x5c] sm:$0xf]
  %v71 = vld [vmem:[%s1 + $0x60] sm:$0xf]
  %v72 = vld [vmem:[%s1 + $0x64] sm:$0xf]
  %v73 = vld [vmem:[%s1 + $0x68] sm:$0xf]
  %v74 = vld [vmem:[%s1 + $0x6c] sm:$0xf]
  %v75 = vld [vmem:[%s1 + $0x70] sm:$0xf]
  %v76 = vld [vmem:[%s1 + $0x74] sm:$0xf]
  %v77 = vld [vmem:[%s1 + $0x78] sm:$0xf]
  %v78 = vld [vmem:[%s1 + $0x7c] sm:$0xf]
  %v79 = vld [vmem:[%s1 + $0x80] sm:$0xf]
  %v80 = vld [vmem:[%s1 + $0x84] sm:$0xf]
  %v81 = vld [vmem:[%s1 + $0x88] sm:$0xf]
  %v82 = vld [vmem:[%s1 + $0x8c] sm:$0xf]
  %v83 = vld [vmem:[%s1 + $0x90] sm:$0xf]
  %v84 = vld [vmem:[%s1 + $0x94] sm:$0xf]
  %v85 = vld [vmem:[%s1 + $0x98] sm:$0xf]
  %v86 = vld [vmem:[%s1 + $0x9c] sm:$0xf]
  %v87 = vld [vmem:[%s1 + $0xa0] sm:$0xf]
  %v88 = vld [vmem:[%s1 + $0xa4] sm:$0xf]
  %v89 = vld [vmem:[%s1 + $0xa8] sm:$0xf]
  %v90 = vld [vmem:[%s1 + $0xac] sm:$0xf]
  %v91 = vld [vmem:[%s1 + $0xb0] sm:$0xf]
  %v92 = vld [vmem:[%s1 + $0xb4] sm:$0xf]
  %v93 = vld [vmem:[%s1 + $0xb8] sm:$0xf]
  %v94 = vld [vmem:[%s1 + $0xbc] sm:$0xf]
  %v95 = vld [vmem:[%s1 + $0xc0] sm:$0xf]
  %v96 = vld [vmem:[%s1 + $0xc4] sm:$0xf]
  %v97 = vld [vmem:[%s1 + $0xc8] sm:$0xf]
  %v98 = vld [vmem:[%s1 + $0xcc] sm:$0xf]
  %v99 = vld [vmem:[%s1 + $0xd0] sm:$0xf]
  %v100 = vld [vmem:[%s1 + $0xd4] sm:$0xf]
  %v101 = vld [vmem:[%s1 + $0xd8] sm:$0xf]
  %v102 = vld [vmem:[%s1 + $0xdc] sm:$0xf]
  %v103 = vld [vmem:[%s1 + $0xe0] sm:$0xf]
  %v104 = vld [vmem:[%s1 + $0xe4] sm:$0xf]
  %v105 = vld [vmem:[%s1 + $0xe8] sm:$0xf]
  %v106 = vld [vmem:[%s1 + $0xec] sm:$0xf]
  %v107 = vld [vmem:[%s1 + $0xf0] sm:$0xf]
  %v108 = vld [vmem:[%s1 + $0xf4] sm:$0xf]
  %v109 = vld [vmem:[%s1 + $0xf8] sm:$0xf]
  %v110 = vld [vmem:[%s1 + $0xfc] sm:$0xf]
  %v111 = vld [vmem:[%s2] sm:$0x1]
  %v113 = vlaneseq
  %v114 = vshrl.u32 %v113, 7
  %v115 = vsub.s32 0, %v114
  %v116 = vrot.slane %v111, %v115
  %v150 = vunpack.c.l.b16 %v15
  %v151 = vunpack.c.h.b16 %v15
  %v152 = vunpack.c.l.b16 %v16
  %v153 = vunpack.c.h.b16 %v16
  %v154 = vunpack.c.l.b16 %v17
  %v155 = vunpack.c.h.b16 %v17
  %v156 = vunpack.c.l.b16 %v18
  %v157 = vunpack.c.h.b16 %v18
  %v158 = vunpack.c.l.b16 %v19
  %v159 = vunpack.c.h.b16 %v19
  %v160 = vunpack.c.l.b16 %v20
  %v161 = vunpack.c.h.b16 %v20
  %v162 = vunpack.c.l.b16 %v21
  %v163 = vunpack.c.h.b16 %v21
  %v164 = vunpack.c.l.b16 %v22
  %v165 = vunpack.c.h.b16 %v22
  %v166 = vunpack.c.l.b16 %v23
  %v167 = vunpack.c.h.b16 %v23
  %v168 = vunpack.c.l.b16 %v24
  %v169 = vunpack.c.h.b16 %v24
  %v170 = vunpack.c.l.b16 %v25
  %v171 = vunpack.c.h.b16 %v25
  %v172 = vunpack.c.l.b16 %v26
  %v173 = vunpack.c.h.b16 %v26
  %v174 = vunpack.c.l.b16 %v27
  %v175 = vunpack.c.h.b16 %v27
  %v176 = vunpack.c.l.b16 %v28
  %v177 = vunpack.c.h.b16 %v28
  %v178 = vunpack.c.l.b16 %v29
  %v179 = vunpack.c.h.b16 %v29
  %v180 = vunpack.c.l.b16 %v30
  %v181 = vunpack.c.h.b16 %v30
  %v182 = vunpack.c.l.b16 %v31
  %v183 = vunpack.c.h.b16 %v31
  %v184 = vunpack.c.l.b16 %v32
  %v185 = vunpack.c.h.b16 %v32
  %v186 = vunpack.c.l.b16 %v33
  %v187 = vunpack.c.h.b16 %v33
  %v188 = vunpack.c.l.b16 %v34
  %v189 = vunpack.c.h.b16 %v34
  %v190 = vunpack.c.l.b16 %v35
  %v191 = vunpack.c.h.b16 %v35
  %v192 = vunpack.c.l.b16 %v36
  %v193 = vunpack.c.h.b16 %v36
  %v194 = vunpack.c.l.b16 %v37
  %v195 = vunpack.c.h.b16 %v37
  %v196 = vunpack.c.l.b16 %v38
  %v197 = vunpack.c.h.b16 %v38
  %v198 = vunpack.c.l.b16 %v39
  %v199 = vunpack.c.h.b16 %v39
  %v200 = vunpack.c.l.b16 %v40
  %v201 = vunpack.c.h.b16 %v40
  %v202 = vunpack.c.l.b16 %v41
  %v203 = vunpack.c.h.b16 %v41
  %v204 = vunpack.c.l.b16 %v42
  %v205 = vunpack.c.h.b16 %v42
  %v206 = vunpack.c.l.b16 %v43
  %v207 = vunpack.c.h.b16 %v43
  %v208 = vunpack.c.l.b16 %v44
  %v209 = vunpack.c.h.b16 %v44
  %v210 = vunpack.c.l.b16 %v45
  %v211 = vunpack.c.h.b16 %v45
  %v212 = vunpack.c.l.b16 %v46
  %v213 = vunpack.c.h.b16 %v46
  %v214 = vpack.c.b16 %v154, %v150
  %v215 = vpack.c.b16 %v155, %v151
  %v216 = vpack.c.b16 %v156, %v152
  %v217 = vpack.c.b16 %v157, %v153
  %v218 = vpack.c.b16 %v162, %v158
  %v219 = vpack.c.b16 %v163, %v159
  %v220 = vpack.c.b16 %v164, %v160
  %v221 = vpack.c.b16 %v165, %v161
  %v222 = vpack.c.b16 %v170, %v166
  %v223 = vpack.c.b16 %v171, %v167
  %v224 = vpack.c.b16 %v172, %v168
  %v225 = vpack.c.b16 %v173, %v169
  %v226 = vpack.c.b16 %v178, %v174
  %v227 = vpack.c.b16 %v179, %v175
  %v228 = vpack.c.b16 %v180, %v176
  %v229 = vpack.c.b16 %v181, %v177
  %v230 = vpack.c.b16 %v186, %v182
  %v231 = vpack.c.b16 %v187, %v183
  %v232 = vpack.c.b16 %v188, %v184
  %v233 = vpack.c.b16 %v189, %v185
  %v234 = vpack.c.b16 %v194, %v190
  %v235 = vpack.c.b16 %v195, %v191
  %v236 = vpack.c.b16 %v196, %v192
  %v237 = vpack.c.b16 %v197, %v193
  %v238 = vpack.c.b16 %v202, %v198
  %v239 = vpack.c.b16 %v203, %v199
  %v240 = vpack.c.b16 %v204, %v200
  %v241 = vpack.c.b16 %v205, %v201
  %v242 = vpack.c.b16 %v210, %v206
  %v243 = vpack.c.b16 %v211, %v207
  %v244 = vpack.c.b16 %v212, %v208
  %v245 = vpack.c.b16 %v213, %v209
  %v342 = vunpack.c.l.b16 %v47
  %v343 = vunpack.c.l.b16 %v48
  %v344 = vunpack.c.l.b16 %v49
  %v345 = vunpack.c.l.b16 %v50
  %v346 = vunpack.c.l.b16 %v51
  %v347 = vunpack.c.l.b16 %v52
  %v348 = vunpack.c.l.b16 %v53
  %v349 = vunpack.c.l.b16 %v54
  %v350 = vunpack.c.l.b16 %v55
  %v351 = vunpack.c.l.b16 %v56
  %v352 = vunpack.c.l.b16 %v57
  %v353 = vunpack.c.l.b16 %v58
  %v354 = vunpack.c.l.b16 %v59
  %v355 = vunpack.c.l.b16 %v60
  %v356 = vunpack.c.l.b16 %v61
  %v357 = vunpack.c.l.b16 %v62
  %v358 = vunpack.c.l.b16 %v63
  %v359 = vunpack.c.l.b16 %v64
  %v360 = vunpack.c.l.b16 %v65
  %v361 = vunpack.c.l.b16 %v66
  %v362 = vunpack.c.l.b16 %v67
  %v363 = vunpack.c.l.b16 %v68
  %v364 = vunpack.c.l.b16 %v69
  %v365 = vunpack.c.l.b16 %v70
  %v366 = vunpack.c.l.b16 %v71
  %v367 = vunpack.c.l.b16 %v72
  %v368 = vunpack.c.l.b16 %v73
  %v369 = vunpack.c.l.b16 %v74
  %v370 = vunpack.c.l.b16 %v75
  %v371 = vunpack.c.l.b16 %v76
  %v372 = vunpack.c.l.b16 %v77
  %v373 = vunpack.c.l.b16 %v78
  %v374 = vunpack.c.l.b16 %v79
  %v375 = vunpack.c.l.b16 %v80
  %v376 = vunpack.c.l.b16 %v81
  %v377 = vunpack.c.l.b16 %v82
  %v378 = vunpack.c.l.b16 %v83
  %v379 = vunpack.c.l.b16 %v84
  %v380 = vunpack.c.l.b16 %v85
  %v381 = vunpack.c.l.b16 %v86
  %v382 = vunpack.c.l.b16 %v87
  %v383 = vunpack.c.l.b16 %v88
  %v384 = vunpack.c.l.b16 %v89
  %v385 = vunpack.c.l.b16 %v90
  %v386 = vunpack.c.l.b16 %v91
  %v387 = vunpack.c.l.b16 %v92
  %v388 = vunpack.c.l.b16 %v93
  %v389 = vunpack.c.l.b16 %v94
  %v390 = vunpack.c.l.b16 %v95
  %v391 = vunpack.c.l.b16 %v96
  %v392 = vunpack.c.l.b16 %v97
  %v393 = vunpack.c.l.b16 %v98
  %v394 = vunpack.c.l.b16 %v99
  %v395 = vunpack.c.l.b16 %v100
  %v396 = vunpack.c.l.b16 %v101
  %v397 = vunpack.c.l.b16 %v102
  %v398 = vunpack.c.l.b16 %v103
  %v399 = vunpack.c.l.b16 %v104
  %v400 = vunpack.c.l.b16 %v105
  %v401 = vunpack.c.l.b16 %v106
  %v402 = vunpack.c.l.b16 %v107
  %v403 = vunpack.c.l.b16 %v108
  %v404 = vunpack.c.l.b16 %v109
  %v405 = vunpack.c.l.b16 %v110
  %v406 = vpack.c.b16 %v343, %v342
  %v407 = vpack.c.b16 %v345, %v344
  %v408 = vpack.c.b16 %v347, %v346
  %v409 = vpack.c.b16 %v349, %v348
  %v410 = vpack.c.b16 %v351, %v350
  %v411 = vpack.c.b16 %v353, %v352
  %v412 = vpack.c.b16 %v355, %v354
  %v413 = vpack.c.b16 %v357, %v356
  %v414 = vpack.c.b16 %v359, %v358
  %v415 = vpack.c.b16 %v361, %v360
  %v416 = vpack.c.b16 %v363, %v362
  %v417 = vpack.c.b16 %v365, %v364
  %v418 = vpack.c.b16 %v367, %v366
  %v419 = vpack.c.b16 %v369, %v368
  %v420 = vpack.c.b16 %v371, %v370
  %v421 = vpack.c.b16 %v373, %v372
  %v422 = vpack.c.b16 %v375, %v374
  %v423 = vpack.c.b16 %v377, %v376
  %v424 = vpack.c.b16 %v379, %v378
  %v425 = vpack.c.b16 %v381, %v380
  %v426 = vpack.c.b16 %v383, %v382
  %v427 = vpack.c.b16 %v385, %v384
  %v428 = vpack.c.b16 %v387, %v386
  %v429 = vpack.c.b16 %v389, %v388
  %v430 = vpack.c.b16 %v391, %v390
  %v431 = vpack.c.b16 %v393, %v392
  %v432 = vpack.c.b16 %v395, %v394
  %v433 = vpack.c.b16 %v397, %v396
  %v434 = vpack.c.b16 %v399, %v398
  %v435 = vpack.c.b16 %v401, %v400
  %v436 = vpack.c.b16 %v403, %v402
  %v437 = vpack.c.b16 %v405, %v404
  %470 = vmatprep.subr.bf16.mxu0 0
  %471 = vmatpush1.bf16.msra.mxu0 %v413
  %472 = vmatprep.subr.bf16.mxu0 0
  %473 = vmatpush1.bf16.msra.mxu0 %v412
  %474 = vmatprep.subr.bf16.mxu0 0
  %475 = vmatpush1.bf16.msra.mxu0 %v411
  %476 = vmatprep.subr.bf16.mxu0 0
  %477 = vmatpush1.bf16.msra.mxu0 %v410
  %478 = vmatprep.subr.bf16.mxu0 0
  %479 = vmatpush1.bf16.msra.mxu0 %v409
  %480 = vmatprep.subr.bf16.mxu0 0
  %481 = vmatpush1.bf16.msra.mxu0 %v408
  %482 = vmatprep.subr.bf16.mxu0 0
  %483 = vmatpush1.bf16.msra.mxu0 %v407
  %484 = vmatprep.subr.bf16.mxu0 0
  %485 = vmatpush1.bf16.msra.mxu0 %v406
  %486 = vmatprep.subr.bf16.mxu0 0
  %487 = vmatpush2.bf16.msra.mxu0 %v421
  %488 = vmatprep.subr.bf16.mxu0 0
  %489 = vmatpush2.bf16.msra.mxu0 %v420
  %490 = vmatprep.subr.bf16.mxu0 0
  %491 = vmatpush2.bf16.msra.mxu0 %v419
  %492 = vmatprep.subr.bf16.mxu0 0
  %493 = vmatpush2.bf16.msra.mxu0 %v418
  %494 = vmatprep.subr.bf16.mxu0 0
  %495 = vmatpush2.bf16.msra.mxu0 %v417
  %496 = vmatprep.subr.bf16.mxu0 0
  %497 = vmatpush2.bf16.msra.mxu0 %v416
  %498 = vmatprep.subr.bf16.mxu0 0
  %499 = vmatpush2.bf16.msra.mxu0 %v415
  %500 = vmatprep.subr.bf16.mxu0 0
  %501 = vmatpush2.bf16.msra.mxu0 %v414
  %502 = vmatprep.mubr.bf16.mxu0 %v215
  %503 = vmatmul.mubr.bf16.gmra.mxu0 %v214
  %v504 = vpop.f32.mrf.mxu0
  %v505 = vadd.f32 %v116, %v504
  %v506 = vpop.f32.mrf.mxu0
  %v507 = vpop.f32.mrf.mxu0
  %v508 = vadd.f32 %v116, %v507
  %v509 = vpop.f32.mrf.mxu0
  %510 = vmatprep.mubr.bf16.mxu0 %v219
  %511 = vmatmul.mubr.bf16.gmra.mxu0 %v218
  %v512 = vpop.f32.mrf.mxu0
  %v513 = vadd.f32 %v116, %v512
  %v514 = vpop.f32.mrf.mxu0
  %v515 = vpop.f32.mrf.mxu0
  %v516 = vadd.f32 %v116, %v515
  %v517 = vpop.f32.mrf.mxu0
  %518 = vmatprep.mubr.bf16.mxu0 %v223
  %519 = vmatmul.mubr.bf16.gmra.mxu0 %v222
  %v520 = vpop.f32.mrf.mxu0
  %v521 = vadd.f32 %v116, %v520
  %v522 = vpop.f32.mrf.mxu0
  %v523 = vpop.f32.mrf.mxu0
  %v524 = vadd.f32 %v116, %v523
  %v525 = vpop.f32.mrf.mxu0
  %526 = vmatprep.mubr.bf16.mxu0 %v227
  %527 = vmatmul.mubr.bf16.gmra.mxu0 %v226
  %v528 = vpop.f32.mrf.mxu0
  %v529 = vadd.f32 %v116, %v528
  %v530 = vpop.f32.mrf.mxu0
  %v531 = vpop.f32.mrf.mxu0
  %v532 = vadd.f32 %v116, %v531
  %v533 = vpop.f32.mrf.mxu0
  %534 = vmatprep.mubr.bf16.mxu0 %v231
  %535 = vmatmul.mubr.bf16.gmra.mxu0 %v230
  %v536 = vpop.f32.mrf.mxu0
  %v537 = vadd.f32 %v116, %v536
  %v538 = vpop.f32.mrf.mxu0
  %v539 = vpop.f32.mrf.mxu0
  %v540 = vadd.f32 %v116, %v539
  %v541 = vpop.f32.mrf.mxu0
  %542 = vmatprep.mubr.bf16.mxu0 %v235
  %543 = vmatmul.mubr.bf16.gmra.mxu0 %v234
  %v544 = vpop.f32.mrf.mxu0
  %v545 = vadd.f32 %v116, %v544
  %v546 = vpop.f32.mrf.mxu0
  %v547 = vpop.f32.mrf.mxu0
  %v548 = vadd.f32 %v116, %v547
  %v549 = vpop.f32.mrf.mxu0
  %550 = vmatprep.mubr.bf16.mxu0 %v239
  %551 = vmatmul.mubr.bf16.gmra.mxu0 %v238
  %v552 = vpop.f32.mrf.mxu0
  %v553 = vadd.f32 %v116, %v552
  %v554 = vpop.f32.mrf.mxu0
  %v555 = vpop.f32.mrf.mxu0
  %v556 = vadd.f32 %v116, %v555
  %v557 = vpop.f32.mrf.mxu0
  %558 = vmatprep.mubr.bf16.mxu0 %v243
  %559 = vmatmul.mubr.bf16.gmra.mxu0 %v242
  %v560 = vpop.f32.mrf.mxu0
  %v561 = vadd.f32 %v116, %v560
  %v562 = vpop.f32.mrf.mxu0
  %v563 = vpop.f32.mrf.mxu0
  %v564 = vadd.f32 %v116, %v563
  %v565 = vpop.f32.mrf.mxu0
  %566 = vdwg.mxu0
  %567 = vmatprep.subr.bf16.mxu0 0
  %568 = vmatpush1.bf16.msra.mxu0 %v429
  %569 = vmatprep.subr.bf16.mxu0 0
  %570 = vmatpush1.bf16.msra.mxu0 %v428
  %571 = vmatprep.subr.bf16.mxu0 0
  %572 = vmatpush1.bf16.msra.mxu0 %v427
  %573 = vmatprep.subr.bf16.mxu0 0
  %574 = vmatpush1.bf16.msra.mxu0 %v426
  %575 = vmatprep.subr.bf16.mxu0 0
  %576 = vmatpush1.bf16.msra.mxu0 %v425
  %577 = vmatprep.subr.bf16.mxu0 0
  %578 = vmatpush1.bf16.msra.mxu0 %v424
  %579 = vmatprep.subr.bf16.mxu0 0
  %580 = vmatpush1.bf16.msra.mxu0 %v423
  %581 = vmatprep.subr.bf16.mxu0 0
  %582 = vmatpush1.bf16.msra.mxu0 %v422
  %583 = vmatprep.subr.bf16.mxu0 0
  %584 = vmatpush2.bf16.msra.mxu0 %v437
  %585 = vmatprep.subr.bf16.mxu0 0
  %586 = vmatpush2.bf16.msra.mxu0 %v436
  %587 = vmatprep.subr.bf16.mxu0 0
  %588 = vmatpush2.bf16.msra.mxu0 %v435
  %589 = vmatprep.subr.bf16.mxu0 0
  %590 = vmatpush2.bf16.msra.mxu0 %v434
  %591 = vmatprep.subr.bf16.mxu0 0
  %592 = vmatpush2.bf16.msra.mxu0 %v433
  %593 = vmatprep.subr.bf16.mxu0 0
  %594 = vmatpush2.bf16.msra.mxu0 %v432
  %595 = vmatprep.subr.bf16.mxu0 0
  %596 = vmatpush2.bf16.msra.mxu0 %v431
  %597 = vmatprep.subr.bf16.mxu0 0
  %598 = vmatpush2.bf16.msra.mxu0 %v430
  %599 = vmatprep.mubr.bf16.mxu0 %v217
  %600 = vmatmul.mubr.bf16.gmra.mxu0 %v216
  %v601 = vpop.f32.mrf.mxu0
  %v602 = vadd.f32 %v505, %v601
  %v603 = vpop.f32.mrf.mxu0
  %v604 = vpop.f32.mrf.mxu0
  %v605 = vadd.f32 %v508, %v604
  %v606 = vpop.f32.mrf.mxu0
  %607 = vmatprep.mubr.bf16.mxu0 %v221
  %608 = vmatmul.mubr.bf16.gmra.mxu0 %v220
  %v609 = vpop.f32.mrf.mxu0
  %v610 = vadd.f32 %v513, %v609
  %v611 = vpop.f32.mrf.mxu0
  %v612 = vpop.f32.mrf.mxu0
  %v613 = vadd.f32 %v516, %v612
  %v614 = vpop.f32.mrf.mxu0
  %615 = vmatprep.mubr.bf16.mxu0 %v225
  %616 = vmatmul.mubr.bf16.gmra.mxu0 %v224
  %v617 = vpop.f32.mrf.mxu0
  %v618 = vadd.f32 %v521, %v617
  %v619 = vpop.f32.mrf.mxu0
  %v620 = vpop.f32.mrf.mxu0
  %v621 = vadd.f32 %v524, %v620
  %v622 = vpop.f32.mrf.mxu0
  %623 = vmatprep.mubr.bf16.mxu0 %v229
  %624 = vmatmul.mubr.bf16.gmra.mxu0 %v228
  %v625 = vpop.f32.mrf.mxu0
  %v626 = vadd.f32 %v529, %v625
  %v627 = vpop.f32.mrf.mxu0
  %v628 = vpop.f32.mrf.mxu0
  %v629 = vadd.f32 %v532, %v628
  %v630 = vpop.f32.mrf.mxu0
  %631 = vmatprep.mubr.bf16.mxu0 %v233
  %632 = vmatmul.mubr.bf16.gmra.mxu0 %v232
  %v633 = vpop.f32.mrf.mxu0
  %v634 = vadd.f32 %v537, %v633
  %v635 = vpop.f32.mrf.mxu0
  %v636 = vpop.f32.mrf.mxu0
  %v637 = vadd.f32 %v540, %v636
  %v638 = vpop.f32.mrf.mxu0
  %639 = vmatprep.mubr.bf16.mxu0 %v237
  %640 = vmatmul.mubr.bf16.gmra.mxu0 %v236
  %v641 = vpop.f32.mrf.mxu0
  %v642 = vadd.f32 %v545, %v641
  %v643 = vpop.f32.mrf.mxu0
  %v644 = vpop.f32.mrf.mxu0
  %v645 = vadd.f32 %v548, %v644
  %v646 = vpop.f32.mrf.mxu0
  %647 = vmatprep.mubr.bf16.mxu0 %v241
  %648 = vmatmul.mubr.bf16.gmra.mxu0 %v240
  %v649 = vpop.f32.mrf.mxu0
  %v650 = vadd.f32 %v553, %v649
  %v651 = vpop.f32.mrf.mxu0
  %v652 = vpop.f32.mrf.mxu0
  %v653 = vadd.f32 %v556, %v652
  %v654 = vpop.f32.mrf.mxu0
  %655 = vmatprep.mubr.bf16.mxu0 %v245
  %656 = vmatmul.mubr.bf16.gmra.mxu0 %v244
  %v657 = vpop.f32.mrf.mxu0
  %v658 = vadd.f32 %v561, %v657
  %v659 = vpop.f32.mrf.mxu0
  %v660 = vpop.f32.mrf.mxu0
  %v661 = vadd.f32 %v564, %v660
  %v662 = vpop.f32.mrf.mxu0
  %663 = vdwg.mxu0
  %664 = vst [vmem:[%s3] sm:$0xff] %v602
  %665 = vst [vmem:[%s3 + $0x8] sm:$0xff] %v605
  %666 = vst [vmem:[%s3 + $0x10] sm:$0xff] %v610
  %667 = vst [vmem:[%s3 + $0x18] sm:$0xff] %v613
  %668 = vst [vmem:[%s3 + $0x20] sm:$0xff] %v618
  %669 = vst [vmem:[%s3 + $0x28] sm:$0xff] %v621
  %670 = vst [vmem:[%s3 + $0x30] sm:$0xff] %v626
  %671 = vst [vmem:[%s3 + $0x38] sm:$0xff] %v629
  %672 = vst [vmem:[%s3 + $0x40] sm:$0xff] %v634
  %673 = vst [vmem:[%s3 + $0x48] sm:$0xff] %v637
  %674 = vst [vmem:[%s3 + $0x50] sm:$0xff] %v642
  %675 = vst [vmem:[%s3 + $0x58] sm:$0xff] %v645
  %676 = vst [vmem:[%s3 + $0x60] sm:$0xff] %v650
  %677 = vst [vmem:[%s3 + $0x68] sm:$0xff] %v653
  %678 = vst [vmem:[%s3 + $0x70] sm:$0xff] %v658
  %679 = vst [vmem:[%s3 + $0x78] sm:$0xff] %v661
  // Predicated region
  $region14: #{_forward_impl.1} parent=0 // pred_check
    _
  $region15: #{_forward_impl.1} parent=0 // pred_check_branch
    %681 = sbr.rel (0) target = $region17
  $region16: #{_forward_impl.1} parent=0 // pred_region
    _
  $region17: #{_forward_impl.1} parent=0 // pred_fallthru
    _
  // Predicated region
  $region18: #{_forward_impl.1} parent=0 // pred_check
    _
  $region19: #{_forward_impl.1} parent=0 // pred_check_branch
    %683 = sbr.rel (0) target = $region21
  $region20: #{_forward_impl.1} parent=0 // pred_region
    _
  $region21: #{_forward_impl.1} parent=0 // pred_fallthru
    _

</llo_original>
